<compile_context>
chip_gen: v7x
topology: tpu7x:2x2x1
jax: 0.10.0
libtpu: 0.0.40
codegen_flags: <defaults>
</compile_context>

<pallas_src>
import functools

import jax
import jax.numpy as jnp
from jax.experimental import pallas as pl
from jax.experimental.pallas import tpu as pltpu


def _up_convt_kernel(x_ref, wb_ref, g_ref, b_ref, o_ref, *, c_out, tl):
    """One (batch, length-tile) block of the stride-2 / kernel-2 ConvTranspose1d.

    x_ref : (1, C_in, tl)      native NCL input tile (length on lanes)
    wb_ref: (K*C_out, C_in)    wb[k*C_out + c, ci] = W[ci, c, k]
    g_ref : (K, 128, 256)      g[k, l, 2*l + k] = 1 (per-chunk interleave matrices)
    b_ref : (C_out, 1)         bias
    o_ref : (1, C_out, 2*tl)   final NCL output tile (positions 2*l + k on lanes)
    """
    x = x_ref[0]  # (C_in, tl)

    # Both taps in one matmul; contraction dim is C_in (small, MXU pads internally).
    yb = jnp.dot(wb_ref[...], x, preferred_element_type=jnp.float32)  # (2*C_out, tl)
    y0 = yb[:c_out, :]   # tap k = 0, (C_out, tl)
    y1 = yb[c_out:, :]   # tap k = 1, (C_out, tl)

    g0 = g_ref[0]        # (128, 256)
    g1 = g_ref[1]

    # Interleave the two taps along the length/lane axis in 128-lane chunks:
    #   part[c, 2*l + k] = y_k[c, chunk_start + l]
    # The 0/1 shuffle matmuls are exact in f32 and run on the otherwise-idle MXU,
    # so the output leaves the kernel already in the final (C_out, 2L) layout.
    parts = []
    for s in range(0, tl, 128):
        w = min(128, tl - s)
        y0c = y0[:, s:s + w]
        y1c = y1[:, s:s + w]
        g0c = g0 if w == 128 else g0[:w, :2 * w]
        g1c = g1 if w == 128 else g1[:w, :2 * w]
        parts.append(
            jnp.dot(y0c, g0c, preferred_element_type=jnp.float32)
            + jnp.dot(y1c, g1c, preferred_element_type=jnp.float32)
        )
    out = parts[0] if len(parts) == 1 else jnp.concatenate(parts, axis=1)  # (C_out, 2*tl)

    o_ref[0] = (out + b_ref[...]).astype(o_ref.dtype)


def up_forward(x_ncl, w_iok, bias, *, max_lane_tile=2048,
               target_out_block_bytes=2 * 1024 * 1024):
    """ConvTranspose1d(C_in, C_out, kernel_size=2, stride=2) forward.

    x_ncl : (N, C_in, L) float32 (PyTorch NCL layout, consumed as-is)
    w_iok : (C_in, C_out, K=2) float32 (PyTorch ConvTranspose1d weight layout)
    bias  : (C_out,) float32
    returns (N, C_out, 2*L) float32 (PyTorch NCL layout, produced directly by the kernel)
    """
    N, C_in, L = x_ncl.shape
    c_in_w, C_out, K = w_iok.shape
    assert c_in_w == C_in and K == 2

    # Tiny wrapper-side constants (weights only — x is never copied/transposed).
    wb = jnp.transpose(w_iok, (2, 1, 0)).reshape(K * C_out, C_in)  # (K*C_out, C_in)
    b2 = bias.reshape(C_out, 1)                                    # (C_out, 1)

    # Per-128-lane-chunk interleave matrices: g[k, l, 2*l + k] = 1, else 0.
    l_idx = jnp.arange(128, dtype=jnp.int32)[:, None]
    m_idx = jnp.arange(256, dtype=jnp.int32)[None, :]
    g = jnp.stack(
        [(m_idx == 2 * l_idx).astype(jnp.float32),
         (m_idx == 2 * l_idx + 1).astype(jnp.float32)],
        axis=0,
    )  # (2, 128, 256)

    # Length tile: lane-dense multiple of 128 sized so the (C_out, 2*tl) f32 output
    # block stays ~<= target bytes (fits default scoped VMEM with double buffering on
    # v5e/v6e/v7x).  If L itself is small, use the full length (block == full dim).
    lane_budget = target_out_block_bytes // (2 * C_out * 4)
    lane_budget = max(128, min(max_lane_tile, (lane_budget // 128) * 128))
    tl = L if L <= lane_budget else lane_budget
    num_l_tiles = pl.cdiv(L, tl)  # edge blocks are clipped; no array padding / wasted work

    kernel = functools.partial(_up_convt_kernel, c_out=C_out, tl=tl)

    return pl.pallas_call(
        kernel,
        out_shape=jax.ShapeDtypeStruct((N, C_out, 2 * L), x_ncl.dtype),
        grid_spec=pltpu.PrefetchScalarGridSpec(
            num_scalar_prefetch=0,
            grid=(N, num_l_tiles),
            in_specs=[
                pl.BlockSpec((1, C_in, tl), lambda n, j: (n, 0, j)),       # x (NCL, as-is)
                pl.BlockSpec((K * C_out, C_in), lambda n, j: (0, 0)),      # folded weights
                pl.BlockSpec((K, 128, 256), lambda n, j: (0, 0, 0)),       # shuffle mats
                pl.BlockSpec((C_out, 1), lambda n, j: (0, 0)),             # bias
            ],
            out_specs=pl.BlockSpec((1, C_out, 2 * tl), lambda n, j: (n, 0, j)),
        ),
        compiler_params=pltpu.CompilerParams(
            dimension_semantics=("parallel", "parallel"),
        ),
    )(x_ncl, wb, g, b2)


def init_up_params(key, in_channel, up_out_channel, kernel_size=2):
    """Deterministic params matching Up.__init__ semantics (ConvTranspose1d branch)."""
    k_w, k_b = jax.random.split(key)
    # Weight: the module's init loop sets '*weight*' to Normal(0, 1e-4).
    # PyTorch ConvTranspose1d weight shape: (C_in, C_out, K).
    w = 0.0001 * jax.random.normal(
        k_w, (in_channel, up_out_channel, kernel_size), jnp.float32
    )
    # Bias keeps the PyTorch default: U(-1/sqrt(fan_in), 1/sqrt(fan_in)) with
    # fan_in = weight.size(1) * receptive_field = up_out_channel * kernel_size.
    bound = 1.0 / jnp.sqrt(jnp.float32(up_out_channel * kernel_size))
    b = jax.random.uniform(k_b, (up_out_channel,), jnp.float32, -bound, bound)
    return dict(w=w, b=b)


def _reference_forward(x_ncl, w_iok, bias):
    """Pure-JAX reference for ConvTranspose1d(kernel_size=2, stride=2, padding=0)."""
    y = jnp.einsum("ncl,cok->nolk", x_ncl, w_iok)  # (N, C_out, L, K)
    n, c_out, l, k = y.shape
    return y.reshape(n, c_out, l * k) + bias[None, :, None]


if __name__ == "__main__":
    key = jax.random.PRNGKey(0)
    key_x, key_p = jax.random.split(key)

    N, IN_CH, L = 2, 4, 16
    UP_OUT_CH = 64  # truthy -> ConvTranspose1d branch of Up

    x = jax.random.normal(key_x, (N, IN_CH, L), jnp.float32)  # PyTorch NCL input
    params = init_up_params(key_p, IN_CH, UP_OUT_CH)

    up_fn = jax.jit(up_forward)
    out = jax.block_until_ready(up_fn(x, params["w"], params["b"]))
    assert out.shape == (N, UP_OUT_CH, 2 * L), out.shape

    ref = jax.block_until_ready(_reference_forward(x, params["w"], params["b"]))
    if not jnp.allclose(out, ref, atol=1e-5, rtol=1e-5):
        raise AssertionError("Pallas kernel disagrees with JAX reference")

    print("KERNEL_OK")
</pallas_src>

<mosaic_0001>
module attributes {stable_mosaic.version = 11 : i64} {
  func.func @_up_convt_kernel(%arg0: i32, %arg1: i32, %arg2: memref<1x4x16xf32, #tpu.memory_space<vmem>>, %arg3: memref<128x4xf32, #tpu.memory_space<vmem>>, %arg4: memref<2x128x256xf32, #tpu.memory_space<vmem>>, %arg5: memref<64x1xf32, #tpu.memory_space<vmem>>, %arg6: memref<1x64x32xf32, #tpu.memory_space<vmem>>) attributes {dimension_semantics = [#tpu.dimension_semantics<parallel>, #tpu.dimension_semantics<parallel>], iteration_bounds = array<i64: 2, 1>, scalar_prefetch = 0 : i64, scratch_operands = 0 : i64, tpu.core_type = #tpu.core_type<tc>, window_params = [{transform_indices = @transform_0, window_bounds = array<i64: 1, 4, 16>}, {pipeline_mode = #tpu.pipeline_mode<synchronous>, transform_indices = @transform_1, window_bounds = array<i64: 128, 4>}, {pipeline_mode = #tpu.pipeline_mode<synchronous>, transform_indices = @transform_2, window_bounds = array<i64: 2, 128, 256>}, {pipeline_mode = #tpu.pipeline_mode<synchronous>, transform_indices = @transform_3, window_bounds = array<i64: 64, 1>}, {transform_indices = @transform_4, window_bounds = array<i64: 1, 64, 32>}]} {
    %c0 = arith.constant 0 : index
    %c0_0 = arith.constant 0 : index
    %c0_1 = arith.constant 0 : index
    %0 = vector.load %arg2[%c0, %c0_0, %c0_1] : memref<1x4x16xf32, #tpu.memory_space<vmem>>, vector<1x4x16xf32>
    %1 = vector.shape_cast %0 : vector<1x4x16xf32> to vector<4x16xf32>
    %c0_2 = arith.constant 0 : index
    %c0_3 = arith.constant 0 : index
    %2 = vector.load %arg3[%c0_2, %c0_3] : memref<128x4xf32, #tpu.memory_space<vmem>>, vector<128x4xf32>
    %cst = arith.constant dense<0.000000e+00> : vector<128x16xf32>
    %3 = tpu.matmul %2, %1, %cst {dimension_numbers = #tpu.dot_dimension_numbers<[1], [0], [0], [1], [0, 0, 1, 1], [], []>} : vector<128x4xf32>, vector<4x16xf32>, vector<128x16xf32> -> vector<128x16xf32>
    %4 = vector.extract_strided_slice %3 {offsets = [0, 0], sizes = [64, 16], strides = [1, 1]} : vector<128x16xf32> to vector<64x16xf32>
    %5 = vector.extract_strided_slice %3 {offsets = [64, 0], sizes = [64, 16], strides = [1, 1]} : vector<128x16xf32> to vector<64x16xf32>
    %c0_4 = arith.constant 0 : index
    %c0_5 = arith.constant 0 : index
    %c0_6 = arith.constant 0 : index
    %6 = vector.load %arg4[%c0_4, %c0_5, %c0_6] : memref<2x128x256xf32, #tpu.memory_space<vmem>>, vector<1x128x256xf32>
    %7 = vector.shape_cast %6 : vector<1x128x256xf32> to vector<128x256xf32>
    %c1 = arith.constant 1 : index
    %c0_7 = arith.constant 0 : index
    %c0_8 = arith.constant 0 : index
    %8 = vector.load %arg4[%c1, %c0_7, %c0_8] : memref<2x128x256xf32, #tpu.memory_space<vmem>>, vector<1x128x256xf32>
    %9 = vector.shape_cast %8 : vector<1x128x256xf32> to vector<128x256xf32>
    %10 = vector.extract_strided_slice %7 {offsets = [0, 0], sizes = [16, 32], strides = [1, 1]} : vector<128x256xf32> to vector<16x32xf32>
    %11 = vector.extract_strided_slice %9 {offsets = [0, 0], sizes = [16, 32], strides = [1, 1]} : vector<128x256xf32> to vector<16x32xf32>
    %cst_9 = arith.constant dense<0.000000e+00> : vector<64x32xf32>
    %12 = tpu.matmul %4, %10, %cst_9 {dimension_numbers = #tpu.dot_dimension_numbers<[1], [0], [0], [1], [0, 0, 1, 1], [], []>} : vector<64x16xf32>, vector<16x32xf32>, vector<64x32xf32> -> vector<64x32xf32>
    %cst_10 = arith.constant dense<0.000000e+00> : vector<64x32xf32>
    %13 = tpu.matmul %5, %11, %cst_10 {dimension_numbers = #tpu.dot_dimension_numbers<[1], [0], [0], [1], [0, 0, 1, 1], [], []>} : vector<64x16xf32>, vector<16x32xf32>, vector<64x32xf32> -> vector<64x32xf32>
    %14 = arith.addf %12, %13 : vector<64x32xf32>
    %c0_11 = arith.constant 0 : index
    %c0_12 = arith.constant 0 : index
    %15 = vector.load %arg5[%c0_11, %c0_12] : memref<64x1xf32, #tpu.memory_space<vmem>>, vector<64x1xf32>
    %16 = vector.broadcast %15 : vector<64x1xf32> to vector<64x32xf32>
    %17 = arith.addf %14, %16 : vector<64x32xf32>
    %c0_13 = arith.constant 0 : index
    %c0_14 = arith.constant 0 : index
    %c0_15 = arith.constant 0 : index
    %18 = vector.load %arg6[%c0_13, %c0_14, %c0_15] : memref<1x64x32xf32, #tpu.memory_space<vmem>>, vector<1x64x32xf32>
    %19 = vector.shape_cast %18 : vector<1x64x32xf32> to vector<64x32xf32>
    %20 = vector.shape_cast %17 : vector<64x32xf32> to vector<1x64x32xf32>
    tpu.vector_store %arg6[%c0_13, %c0_14, %c0_15], %20 {strides = array<i32>} : memref<1x64x32xf32, #tpu.memory_space<vmem>>, vector<1x64x32xf32>,
    return
  }
  func.func @transform_0(%arg0: i32, %arg1: i32) -> (i32, i32, i32) {
    %c0_i32 = arith.constant 0 : i32
    %c0_i32_0 = arith.constant 0 : i32
    return %arg0, %c0_i32, %arg1 : i32, i32, i32
  }
  func.func @transform_1(%arg0: i32, %arg1: i32) -> (i32, i32) {
    %c0_i32 = arith.constant 0 : i32
    %c0_i32_0 = arith.constant 0 : i32
    %c0_i32_1 = arith.constant 0 : i32
    return %c0_i32, %c0_i32_0 : i32, i32
  }
  func.func @transform_2(%arg0: i32, %arg1: i32) -> (i32, i32, i32) {
    %c0_i32 = arith.constant 0 : i32
    %c0_i32_0 = arith.constant 0 : i32
    %c0_i32_1 = arith.constant 0 : i32
    %c0_i32_2 = arith.constant 0 : i32
    return %c0_i32, %c0_i32_0, %c0_i32_1 : i32, i32, i32
  }
  func.func @transform_3(%arg0: i32, %arg1: i32) -> (i32, i32) {
    %c0_i32 = arith.constant 0 : i32
    %c0_i32_0 = arith.constant 0 : i32
    %c0_i32_1 = arith.constant 0 : i32
    return %c0_i32, %c0_i32_0 : i32, i32
  }
  func.func @transform_4(%arg0: i32, %arg1: i32) -> (i32, i32, i32) {
    %c0_i32 = arith.constant 0 : i32
    %c0_i32_0 = arith.constant 0 : i32
    return %arg0, %c0_i32, %arg1 : i32, i32, i32
  }
}

</mosaic_0001>

<llo_original>
// kernel: up_forward.1
$region0: #{up_forward.1}
  #allocation0 [shape = 'u32[]', space=smem, size = 0x4, offset = 0x4, fixed_abs, tag = 'smem constant byte address 0x4 - core index']
  #allocation1 [shape = 'u32[144,128]{1,0:T(1,128)}', space=vmem, size = 0x12000, scoped, tag = 'internal scratch']
  %s0 = inlined_call_operand.vmem [shape: f32[2,4,16], index: 0, kind: input, shape index: {}]
  %s1 = inlined_call_operand.vmem [shape: f32[128,4], index: 1, kind: input, shape index: {}]
  %s2 = inlined_call_operand.vmem [shape: f32[2,128,256], index: 2, kind: input, shape index: {}]
  %s3 = inlined_call_operand.vmem [shape: f32[64,1], index: 3, kind: input, shape index: {}]
  %s4 = inlined_call_operand.vmem [shape: f32[2,64,32], index: 4, kind: output, shape index: {}]
  %s5 = sld [smem:[#allocation0]]
  $region49: #{up_forward.1} parent=0
    _
  %s7 = ssub.s32 1, %s5
  %s8 = scalar_select 0, %s7, %s5
  loop: start=0, step=1, limit=4
  $region2: #{up_forward.1} parent=0 // loop_pre_header
    _
  $region3: #{up_forward.1} parent=0 // loop_header
    %s10 = sphi 0, %s14
    %p11 = scmp.ge.s32.totalorder %s10, 4
    %s17 = sphi 0, %s29
    %s18 = sphi 0, %s25
    %s19 = sphi 0, %s17
    %s20 = sphi 0, %s18
    %s21 = sphi 0, %s19
    %s22 = sphi 0, %s20
    %s34 = sphi 0, %s36
    %s37 = sphi 0, %s34
    %s38 = sphi 0, %s37
    %s54 = sphi 0, %s38
    %s58 = sphi 0, %s58
    %s60 = sphi 0, %s58
    %s61 = sphi 0, %s60
    %s75 = sphi 0, %s61
    %s79 = sphi 0, %s79
    %s81 = sphi 0, %s79
    %s82 = sphi 0, %s81
    %s96 = sphi 0, %s82
    %s100 = sphi 0, %s100
    %s102 = sphi 0, %s100
    %s103 = sphi 0, %s102
    %s117 = sphi 0, %s103
    %s125 = sphi 0, %s127
    %s128 = sphi 0, %s125
    %s129 = sphi 0, %s128
    %s145 = sphi 0, %s129
  $region4: #{up_forward.1} parent=0 // loop_header_branch
    %13 = sbr.rel (%p11) target = $region8
  $region5: #{up_forward.1} parent=0 // loop_body
    %s15 = ssub.s32 %s10, 1
    %s16 = ssub.s32 %s10, 2
    %s23 = sadd.s32 1, %s18
    %p24 = scmp.ge.s32.totalorder %s23, 1
    %s25 = scalar_select %p24, 0, %s23
    %s26 = sadd.s32 1, %s17
    %s27 = scalar_select %p24, %s26, %s17
    %p28 = scmp.ge.s32.totalorder %s27, 2
    %s29 = scalar_select %p28, 0, %s27
    %s30 = ssub.s32 %s17, %s29
    %s31 = ssub.s32 %s18, %s25
    %s32 = sor.u32 %s30, %s31
    %p33 = scmp.eq.s32.totalorder %s32, 0
    %s35 = sadd.s32 %s34, 1
    %s36 = scalar_select %p33, %s34, %s35
    %p39 = pneg %p33
    %p40 = scmp.eq.s32.totalorder %s10, 1
    %p41 = por %p39, %p40
    %p42 = scmp.ne.s32.totalorder %s34, %s37
    %p43 = scmp.eq.s32.totalorder %s10, 0
    %p44 = por %p42, %p43
    %p45 = scmp.ne.s32.totalorder %s34, %s37
    %p46 = scmp.eq.s32.totalorder %s15, 1
    %p47 = por %p45, %p46
    %p48 = scmp.ne.s32.totalorder %s37, %s38
    %p49 = scmp.eq.s32.totalorder %s15, 0
    %p50 = por %p48, %p49
    %p51 = scmp.ne.s32.totalorder %s37, %s38
    %p52 = scmp.eq.s32.totalorder %s16, 1
    %p53 = por %p51, %p52
    %p55 = scmp.ne.s32.totalorder %s38, %s54
    %p56 = scmp.eq.s32.totalorder %s16, 0
    %p57 = por %p55, %p56
    %s59 = sadd.s32 %s58, 1
    %p62 = scmp.eq.s32.totalorder %s10, 1
    %p63 = scmp.ne.s32.totalorder %s58, %s60
    %p64 = scmp.eq.s32.totalorder %s10, 0
    %p65 = por %p63, %p64
    %p66 = scmp.ne.s32.totalorder %s58, %s60
    %p67 = scmp.eq.s32.totalorder %s15, 1
    %p68 = por %p66, %p67
    %p69 = scmp.ne.s32.totalorder %s60, %s61
    %p70 = scmp.eq.s32.totalorder %s15, 0
    %p71 = por %p69, %p70
    %p72 = scmp.ne.s32.totalorder %s60, %s61
    %p73 = scmp.eq.s32.totalorder %s16, 1
    %p74 = por %p72, %p73
    %p76 = scmp.ne.s32.totalorder %s61, %s75
    %p77 = scmp.eq.s32.totalorder %s16, 0
    %p78 = por %p76, %p77
    %s80 = sadd.s32 %s79, 1
    %p83 = scmp.eq.s32.totalorder %s10, 1
    %p84 = scmp.ne.s32.totalorder %s79, %s81
    %p85 = scmp.eq.s32.totalorder %s10, 0
    %p86 = por %p84, %p85
    %p87 = scmp.ne.s32.totalorder %s79, %s81
    %p88 = scmp.eq.s32.totalorder %s15, 1
    %p89 = por %p87, %p88
    %p90 = scmp.ne.s32.totalorder %s81, %s82
    %p91 = scmp.eq.s32.totalorder %s15, 0
    %p92 = por %p90, %p91
    %p93 = scmp.ne.s32.totalorder %s81, %s82
    %p94 = scmp.eq.s32.totalorder %s16, 1
    %p95 = por %p93, %p94
    %p97 = scmp.ne.s32.totalorder %s82, %s96
    %p98 = scmp.eq.s32.totalorder %s16, 0
    %p99 = por %p97, %p98
    %s101 = sadd.s32 %s100, 1
    %p104 = scmp.eq.s32.totalorder %s10, 1
    %p105 = scmp.ne.s32.totalorder %s100, %s102
    %p106 = scmp.eq.s32.totalorder %s10, 0
    %p107 = por %p105, %p106
    %p108 = scmp.ne.s32.totalorder %s100, %s102
    %p109 = scmp.eq.s32.totalorder %s15, 1
    %p110 = por %p108, %p109
    %p111 = scmp.ne.s32.totalorder %s102, %s103
    %p112 = scmp.eq.s32.totalorder %s15, 0
    %p113 = por %p111, %p112
    %p114 = scmp.ne.s32.totalorder %s102, %s103
    %p115 = scmp.eq.s32.totalorder %s16, 1
    %p116 = por %p114, %p115
    %p118 = scmp.ne.s32.totalorder %s103, %s117
    %p119 = scmp.eq.s32.totalorder %s16, 0
    %p120 = por %p118, %p119
    %s121 = ssub.s32 %s17, %s29
    %s122 = ssub.s32 %s18, %s25
    %s123 = sor.u32 %s121, %s122
    %p124 = scmp.eq.s32.totalorder %s123, 0
    %s126 = sadd.s32 %s125, 1
    %s127 = scalar_select %p124, %s125, %s126
    %p130 = pneg %p124
    %p131 = scmp.eq.s32.totalorder %s10, 1
    %p132 = por %p130, %p131
    %p133 = scmp.ne.s32.totalorder %s125, %s128
    %p134 = scmp.eq.s32.totalorder %s10, 0
    %p135 = por %p133, %p134
    %p136 = scmp.ne.s32.totalorder %s125, %s128
    %p137 = scmp.eq.s32.totalorder %s15, 1
    %p138 = por %p136, %p137
    %p139 = scmp.ne.s32.totalorder %s128, %s129
    %p140 = scmp.eq.s32.totalorder %s15, 0
    %p141 = por %p139, %p140
    %p142 = scmp.ne.s32.totalorder %s128, %s129
    %p143 = scmp.eq.s32.totalorder %s16, 1
    %p144 = por %p142, %p143
    %p146 = scmp.ne.s32.totalorder %s129, %s145
    %p147 = scmp.eq.s32.totalorder %s16, 0
    %p148 = por %p146, %p147
    %p149 = scmp.le.s32.totalorder 1, %s10
    %p150 = scmp.lt.s32.totalorder %s10, 3
    %p151 = pnand %p149, %p150
    %p152 = pneg %p151
    // Predicated region
    $region9: #{up_forward.1} parent=5 // pred_check
      _
    $region10: #{up_forward.1} parent=5 // pred_check_branch
      %154 = sbr.rel (%p151) target = $region12
    $region11: #{up_forward.1} parent=5 // pred_region
      %s155 = ssub.s32 %s10, 1
      // Predicated region
      $region13: #{up_forward.1} parent=11 // pred_check
        %p156 = pneg %p71
      $region14: #{up_forward.1} parent=11 // pred_check_branch
        %158 = sbr.rel (%p156) target = $region16
      $region15: #{up_forward.1} parent=11 // pred_region
        _
      $region16: #{up_forward.1} parent=11 // pred_fallthru
        _
      // Predicated region
      $region17: #{up_forward.1} parent=11 // pred_check
        %p159 = pneg %p92
      $region18: #{up_forward.1} parent=11 // pred_check_branch
        %161 = sbr.rel (%p159) target = $region20
      $region19: #{up_forward.1} parent=11 // pred_region
        _
      $region20: #{up_forward.1} parent=11 // pred_fallthru
        _
      // Predicated region
      $region21: #{up_forward.1} parent=11 // pred_check
        %p162 = pneg %p113
      $region22: #{up_forward.1} parent=11 // pred_check_branch
        %164 = sbr.rel (%p162) target = $region24
      $region23: #{up_forward.1} parent=11 // pred_region
        _
      $region24: #{up_forward.1} parent=11 // pred_fallthru
        _
    $region12: #{up_forward.1} parent=5 // pred_fallthru
      _
    %p165 = scmp.lt.s32.totalorder %s10, 2
    // Predicated region
    $region25: #{up_forward.1} parent=5 // pred_check
      %p166 = pneg %p165
    $region26: #{up_forward.1} parent=5 // pred_check_branch
      %168 = sbr.rel (%p166) target = $region28
    $region27: #{up_forward.1} parent=5 // pred_region
      // Predicated region
      $region29: #{up_forward.1} parent=27 // pred_check
        %p169 = pneg %p44
      $region30: #{up_forward.1} parent=27 // pred_check_branch
        %171 = sbr.rel (%p169) target = $region32
      $region31: #{up_forward.1} parent=27 // pred_region
        %p172 = scmp.lt.s32.totalorder %s17, 1
        %s173 = scalar_select %p172, %s17, 1
        %p174 = scmp.lt.s32.totalorder %s18, 0
        %s175 = scalar_select %p174, %s18, 0
        %s176 = sadd.s32 %s175, %s173
        %s177 = smul.addr %s176, 4
        %s178 = scalar_lea.vmem %s0, %s177
      $region32: #{up_forward.1} parent=27 // pred_fallthru
        _
    $region28: #{up_forward.1} parent=5 // pred_fallthru
      _
    %p179 = scmp.le.s32.totalorder 1, %s10
    %p180 = scmp.lt.s32.totalorder %s10, 3
    %p181 = pnand %p179, %p180
    %p182 = pneg %p181
    // Predicated region
    $region33: #{up_forward.1} parent=5 // pred_check
      _
    $region34: #{up_forward.1} parent=5 // pred_check_branch
      %184 = sbr.rel (%p181) target = $region36
    $region35: #{up_forward.1} parent=5 // pred_region
      %s185 = ssub.s32 %s10, 1
      %p186 = scmp.lt.s32.totalorder %s19, 1
      %s187 = scalar_select %p186, %s19, 1
      %p188 = scmp.lt.s32.totalorder %s20, 0
      %s189 = scalar_select %p188, %s20, 0
      %s190 = sadd.s32 %s189, %s187
      %s191 = smul.addr %s190, 4
      %s192 = scalar_lea.vmem %s0, %s191
      %p193 = pneg %p50
      %p194 = pneg %p47
      %p195 = pneg %p71
      %p196 = pneg %p68
      %p197 = pneg %p92
      %p198 = pneg %p89
      %p199 = pneg %p113
      %p200 = pneg %p110
      %p201 = pneg %p141
      %p202 = pneg %p138
      %p203 = scmp.lt.s32.totalorder %s19, 1
      %s204 = scalar_select %p203, %s19, 1
      %p205 = scmp.lt.s32.totalorder %s20, 0
      %s206 = scalar_select %p205, %s20, 0
      %s207 = smul.addr %s204, 8
      %s208 = sadd.s32 %s206, %s207
      %s209 = smul.addr %s208, 8
      %s210 = scalar_lea.vmem %s4, %s209
      %p211 = scmp.lt.s32.totalorder %s19, 1
      %s212 = scalar_select %p211, %s19, 1
      %p213 = scmp.lt.s32.totalorder %s20, 0
      %s214 = scalar_select %p213, %s20, 0
      %s215 = sadd.s32 %s214, %s212
      %s216 = smul.addr %s215, 4
      %s217 = scalar_lea.vmem %s0, %s216
      %p218 = scmp.lt.s32.totalorder %s19, 1
      %s219 = scalar_select %p218, %s19, 1
      %p220 = scmp.lt.s32.totalorder %s20, 0
      %s221 = scalar_select %p220, %s20, 0
      %s222 = smul.addr %s219, 8
      %s223 = sadd.s32 %s221, %s222
      %s224 = smul.addr %s223, 8
      %s225 = scalar_lea.vmem %s4, %s224
      %v226 = vld [vmem:[%s217] sm:$0xf]
      %v227 = vld [vmem:[%s1] sm:$0xff]
      %v228 = vld [vmem:[%s1 + $0x8] sm:$0xff]
      %v229 = vld [vmem:[%s1 + $0x10] sm:$0xff]
      %v230 = vld [vmem:[%s1 + $0x18] sm:$0xff]
      %v231 = vld [vmem:[%s1 + $0x20] sm:$0xff]
      %v232 = vld [vmem:[%s1 + $0x28] sm:$0xff]
      %v233 = vld [vmem:[%s1 + $0x30] sm:$0xff]
      %v234 = vld [vmem:[%s1 + $0x38] sm:$0xff]
      %v235 = vld [vmem:[%s1 + $0x40] sm:$0xff]
      %v236 = vld [vmem:[%s1 + $0x48] sm:$0xff]
      %v237 = vld [vmem:[%s1 + $0x50] sm:$0xff]
      %v238 = vld [vmem:[%s1 + $0x58] sm:$0xff]
      %v239 = vld [vmem:[%s1 + $0x60] sm:$0xff]
      %v240 = vld [vmem:[%s1 + $0x68] sm:$0xff]
      %v241 = vld [vmem:[%s1 + $0x70] sm:$0xff]
      %v242 = vld [vmem:[%s1 + $0x78] sm:$0xff]
      %vm243 = vcmask 31744
      %v245 = vsel %vm243, %v227, 0
      %v248 = vsel %vm243, %v228, 0
      %v251 = vsel %vm243, %v229, 0
      %v254 = vsel %vm243, %v230, 0
      %v257 = vsel %vm243, %v231, 0
      %v260 = vsel %vm243, %v232, 0
      %v263 = vsel %vm243, %v233, 0
      %v266 = vsel %vm243, %v234, 0
      %v269 = vsel %vm243, %v235, 0
      %v272 = vsel %vm243, %v236, 0
      %v275 = vsel %vm243, %v237, 0
      %v278 = vsel %vm243, %v238, 0
      %v281 = vsel %vm243, %v239, 0
      %v284 = vsel %vm243, %v240, 0
      %v287 = vsel %vm243, %v241, 0
      %v290 = vsel %vm243, %v242, 0
      %vm292 = vcmask 1043456
      %v294 = vsel %vm292, %v226, 0
      %296 = vmatprep.subr.mxu0 0.0
      %297 = vmatpush1.msra.mxu0 %v294
      %298 = vmatprep.subr.mxu0 0.0
      %299 = vmatpush1.msra.mxu0 0.0
      %300 = vmatprep.subr.mxu0 0.0
      %301 = vmatpush1.msra.mxu0 0.0
      %302 = vmatprep.subr.mxu0 0.0
      %303 = vmatpush1.msra.mxu0 0.0
      %304 = vmatprep.subr.mxu0 0.0
      %305 = vmatpush1.msra.mxu0 0.0
      %306 = vmatprep.subr.mxu0 0.0
      %307 = vmatpush1.msra.mxu0 0.0
      %308 = vmatprep.subr.mxu0 0.0
      %309 = vmatpush1.msra.mxu0 0.0
      %310 = vmatprep.subr.mxu0 0.0
      %311 = vmatpush1.msra.mxu0 0.0
      %312 = vmatprep.subr.mxu0 0.0
      %313 = vmatpush1.msra.mxu0 0.0
      %314 = vmatprep.subr.mxu0 0.0
      %315 = vmatpush1.msra.mxu0 0.0
      %316 = vmatprep.subr.mxu0 0.0
      %317 = vmatpush1.msra.mxu0 0.0
      %318 = vmatprep.subr.mxu0 0.0
      %319 = vmatpush1.msra.mxu0 0.0
      %320 = vmatprep.subr.mxu0 0.0
      %321 = vmatpush1.msra.mxu0 0.0
      %322 = vmatprep.subr.mxu0 0.0
      %323 = vmatpush1.msra.mxu0 0.0
      %324 = vmatprep.subr.mxu0 0.0
      %325 = vmatpush1.msra.mxu0 0.0
      %326 = vmatprep.subr.mxu0 0.0
      %327 = vmatpush1.msra.mxu0 0.0
      %328 = vmatprep.subr.mxu0 0.0
      %329 = vmatpush1.msra.mxu0 0.0
      %330 = vmatprep.subr.mxu0 0.0
      %331 = vmatpush1.msra.mxu0 0.0
      %332 = vmatprep.subr.mxu0 0.0
      %333 = vmatpush1.msra.mxu0 0.0
      %334 = vmatprep.subr.mxu0 0.0
      %335 = vmatpush1.msra.mxu0 0.0
      %336 = vmatprep.subr.mxu0 0.0
      %337 = vmatpush1.msra.mxu0 0.0
      %338 = vmatprep.subr.mxu0 0.0
      %339 = vmatpush1.msra.mxu0 0.0
      %340 = vmatprep.subr.mxu0 0.0
      %341 = vmatpush1.msra.mxu0 0.0
      %342 = vmatprep.subr.mxu0 0.0
      %343 = vmatpush1.msra.mxu0 0.0
      %344 = vmatprep.subr.mxu0 0.0
      %345 = vmatpush1.msra.mxu0 0.0
      %346 = vmatprep.subr.mxu0 0.0
      %347 = vmatpush1.msra.mxu0 0.0
      %348 = vmatprep.subr.mxu0 0.0
      %349 = vmatpush1.msra.mxu0 0.0
      %350 = vmatprep.subr.mxu0 0.0
      %351 = vmatpush1.msra.mxu0 0.0
      %352 = vmatprep.subr.mxu0 0.0
      %353 = vmatpush1.msra.mxu0 0.0
      %354 = vmatprep.subr.mxu0 0.0
      %355 = vmatpush1.msra.mxu0 0.0
      %356 = vmatprep.subr.mxu0 0.0
      %357 = vmatpush1.msra.mxu0 0.0
      %358 = vmatprep.subr.mxu0 0.0
      %359 = vmatpush1.msra.mxu0 0.0
      %360 = vmatprep.mubr.f32.mxu0 0.0
      %361 = vmatmul.mubr.f32.gmra.mrb[0].mxu0 %v245
      %v362 = vpop.f32.mrb[0].mxu0
      %v363 = vadd.f32 0.0, %v362
      %v364 = vpop.f32.mrb[0].mxu0
      %365 = vmatprep.mubr.f32.mxu0 0.0
      %366 = vmatmul.mubr.f32.gmra.mrb[0].mxu0 %v248
      %v367 = vpop.f32.mrb[0].mxu0
      %v368 = vadd.f32 0.0, %v367
      %v369 = vpop.f32.mrb[0].mxu0
      %370 = vmatprep.mubr.f32.mxu0 0.0
      %371 = vmatmul.mubr.f32.gmra.mrb[0].mxu0 %v251
      %v372 = vpop.f32.mrb[0].mxu0
      %v373 = vadd.f32 0.0, %v372
      %v374 = vpop.f32.mrb[0].mxu0
      %375 = vmatprep.mubr.f32.mxu0 0.0
      %376 = vmatmul.mubr.f32.gmra.mrb[0].mxu0 %v254
      %v377 = vpop.f32.mrb[0].mxu0
      %v378 = vadd.f32 0.0, %v377
      %v379 = vpop.f32.mrb[0].mxu0
      %380 = vmatprep.mubr.f32.mxu0 0.0
      %381 = vmatmul.mubr.f32.gmra.mrb[0].mxu0 %v257
      %v382 = vpop.f32.mrb[0].mxu0
      %v383 = vadd.f32 0.0, %v382
      %v384 = vpop.f32.mrb[0].mxu0
      %385 = vmatprep.mubr.f32.mxu0 0.0
      %386 = vmatmul.mubr.f32.gmra.mrb[0].mxu0 %v260
      %v387 = vpop.f32.mrb[0].mxu0
      %v388 = vadd.f32 0.0, %v387
      %v389 = vpop.f32.mrb[0].mxu0
      %390 = vmatprep.mubr.f32.mxu0 0.0
      %391 = vmatmul.mubr.f32.gmra.mrb[0].mxu0 %v263
      %v392 = vpop.f32.mrb[0].mxu0
      %v393 = vadd.f32 0.0, %v392
      %v394 = vpop.f32.mrb[0].mxu0
      %395 = vmatprep.mubr.f32.mxu0 0.0
      %396 = vmatmul.mubr.f32.gmra.mrb[0].mxu0 %v266
      %v397 = vpop.f32.mrb[0].mxu0
      %v398 = vadd.f32 0.0, %v397
      %v399 = vpop.f32.mrb[0].mxu0
      %400 = vmatprep.mubr.f32.mxu0 0.0
      %401 = vmatmul.mubr.f32.gmra.mrb[0].mxu0 %v269
      %v402 = vpop.f32.mrb[0].mxu0
      %v403 = vadd.f32 0.0, %v402
      %v404 = vpop.f32.mrb[0].mxu0
      %405 = vmatprep.mubr.f32.mxu0 0.0
      %406 = vmatmul.mubr.f32.gmra.mrb[0].mxu0 %v272
      %v407 = vpop.f32.mrb[0].mxu0
      %v408 = vadd.f32 0.0, %v407
      %v409 = vpop.f32.mrb[0].mxu0
      %410 = vmatprep.mubr.f32.mxu0 0.0
      %411 = vmatmul.mubr.f32.gmra.mrb[0].mxu0 %v275
      %v412 = vpop.f32.mrb[0].mxu0
      %v413 = vadd.f32 0.0, %v412
      %v414 = vpop.f32.mrb[0].mxu0
      %415 = vmatprep.mubr.f32.mxu0 0.0
      %416 = vmatmul.mubr.f32.gmra.mrb[0].mxu0 %v278
      %v417 = vpop.f32.mrb[0].mxu0
      %v418 = vadd.f32 0.0, %v417
      %v419 = vpop.f32.mrb[0].mxu0
      %420 = vmatprep.mubr.f32.mxu0 0.0
      %421 = vmatmul.mubr.f32.gmra.mrb[0].mxu0 %v281
      %v422 = vpop.f32.mrb[0].mxu0
      %v423 = vadd.f32 0.0, %v422
      %v424 = vpop.f32.mrb[0].mxu0
      %425 = vmatprep.mubr.f32.mxu0 0.0
      %426 = vmatmul.mubr.f32.gmra.mrb[0].mxu0 %v284
      %v427 = vpop.f32.mrb[0].mxu0
      %v428 = vadd.f32 0.0, %v427
      %v429 = vpop.f32.mrb[0].mxu0
      %430 = vmatprep.mubr.f32.mxu0 0.0
      %431 = vmatmul.mubr.f32.gmra.mrb[0].mxu0 %v287
      %v432 = vpop.f32.mrb[0].mxu0
      %v433 = vadd.f32 0.0, %v432
      %v434 = vpop.f32.mrb[0].mxu0
      %435 = vmatprep.mubr.f32.mxu0 0.0
      %436 = vmatmul.mubr.f32.gmra.mrb[0].mxu0 %v290
      %v437 = vpop.f32.mrb[0].mxu0
      %v438 = vadd.f32 0.0, %v437
      %v439 = vpop.f32.mrb[0].mxu0
      %440 = vdwg.mxu0
      %v441 = vld [vmem:[%s2] sm:$0xff]
      %v442 = vld [vmem:[%s2 + $0x10] sm:$0xff]
      %s443 = scalar_lea.vmem %s2, 256
      %v444 = vld [vmem:[%s443] sm:$0xff]
      %v445 = vld [vmem:[%s443 + $0x10] sm:$0xff]
      %vm446 = vcmask 130048
      %v448 = vsel %vm446, %v403, 0
      %v451 = vsel %vm446, %v408, 0
      %v454 = vsel %vm446, %v413, 0
      %v457 = vsel %vm446, %v418, 0
      %v460 = vsel %vm446, %v423, 0
      %v463 = vsel %vm446, %v428, 0
      %v466 = vsel %vm446, %v433, 0
      %v469 = vsel %vm446, %v438, 0
      %471 = vmatprep.subr.mxu0 0.0
      %472 = vmatpush1.msra.mxu0 %v444
      %473 = vmatprep.subr.mxu0 0.0
      %474 = vmatpush1.msra.mxu0 %v445
      %475 = vmatprep.subr.mxu0 0.0
      %476 = vmatpush1.msra.mxu0 0.0
      %477 = vmatprep.subr.mxu0 0.0
      %478 = vmatpush1.msra.mxu0 0.0
      %479 = vmatprep.subr.mxu0 0.0
      %480 = vmatpush1.msra.mxu0 0.0
      %481 = vmatprep.subr.mxu0 0.0
      %482 = vmatpush1.msra.mxu0 0.0
      %483 = vmatprep.subr.mxu0 0.0
      %484 = vmatpush1.msra.mxu0 0.0
      %485 = vmatprep.subr.mxu0 0.0
      %486 = vmatpush1.msra.mxu0 0.0
      %487 = vmatprep.subr.mxu0 0.0
      %488 = vmatpush1.msra.mxu0 0.0
      %489 = vmatprep.subr.mxu0 0.0
      %490 = vmatpush1.msra.mxu0 0.0
      %491 = vmatprep.subr.mxu0 0.0
      %492 = vmatpush1.msra.mxu0 0.0
      %493 = vmatprep.subr.mxu0 0.0
      %494 = vmatpush1.msra.mxu0 0.0
      %495 = vmatprep.subr.mxu0 0.0
      %496 = vmatpush1.msra.mxu0 0.0
      %497 = vmatprep.subr.mxu0 0.0
      %498 = vmatpush1.msra.mxu0 0.0
      %499 = vmatprep.subr.mxu0 0.0
      %500 = vmatpush1.msra.mxu0 0.0
      %501 = vmatprep.subr.mxu0 0.0
      %502 = vmatpush1.msra.mxu0 0.0
      %503 = vmatprep.subr.mxu0 0.0
      %504 = vmatpush1.msra.mxu0 0.0
      %505 = vmatprep.subr.mxu0 0.0
      %506 = vmatpush1.msra.mxu0 0.0
      %507 = vmatprep.subr.mxu0 0.0
      %508 = vmatpush1.msra.mxu0 0.0
      %509 = vmatprep.subr.mxu0 0.0
      %510 = vmatpush1.msra.mxu0 0.0
      %511 = vmatprep.subr.mxu0 0.0
      %512 = vmatpush1.msra.mxu0 0.0
      %513 = vmatprep.subr.mxu0 0.0
      %514 = vmatpush1.msra.mxu0 0.0
      %515 = vmatprep.subr.mxu0 0.0
      %516 = vmatpush1.msra.mxu0 0.0
      %517 = vmatprep.subr.mxu0 0.0
      %518 = vmatpush1.msra.mxu0 0.0
      %519 = vmatprep.subr.mxu0 0.0
      %520 = vmatpush1.msra.mxu0 0.0
      %521 = vmatprep.subr.mxu0 0.0
      %522 = vmatpush1.msra.mxu0 0.0
      %523 = vmatprep.subr.mxu0 0.0
      %524 = vmatpush1.msra.mxu0 0.0
      %525 = vmatprep.subr.mxu0 0.0
      %526 = vmatpush1.msra.mxu0 0.0
      %527 = vmatprep.subr.mxu0 0.0
      %528 = vmatpush1.msra.mxu0 0.0
      %529 = vmatprep.subr.mxu0 0.0
      %530 = vmatpush1.msra.mxu0 0.0
      %531 = vmatprep.subr.mxu0 0.0
      %532 = vmatpush1.msra.mxu0 0.0
      %533 = vmatprep.subr.mxu0 0.0
      %534 = vmatpush1.msra.mxu0 0.0
      %535 = vmatprep.mubr.f32.mxu0 0.0
      %536 = vmatmul.mubr.f32.gmra.mrb[0].mxu0 %v448
      %v537 = vpop.f32.mrb[0].mxu0
      %v538 = vadd.f32 0.0, %v537
      %v539 = vpop.f32.mrb[0].mxu0
      %540 = vmatprep.mubr.f32.mxu0 0.0
      %541 = vmatmul.mubr.f32.gmra.mrb[0].mxu0 %v451
      %v542 = vpop.f32.mrb[0].mxu0
      %v543 = vadd.f32 0.0, %v542
      %v544 = vpop.f32.mrb[0].mxu0
      %545 = vmatprep.mubr.f32.mxu0 0.0
      %546 = vmatmul.mubr.f32.gmra.mrb[0].mxu0 %v454
      %v547 = vpop.f32.mrb[0].mxu0
      %v548 = vadd.f32 0.0, %v547
      %v549 = vpop.f32.mrb[0].mxu0
      %550 = vmatprep.mubr.f32.mxu0 0.0
      %551 = vmatmul.mubr.f32.gmra.mrb[0].mxu0 %v457
      %v552 = vpop.f32.mrb[0].mxu0
      %v553 = vadd.f32 0.0, %v552
      %v554 = vpop.f32.mrb[0].mxu0
      %555 = vmatprep.mubr.f32.mxu0 0.0
      %556 = vmatmul.mubr.f32.gmra.mrb[0].mxu0 %v460
      %v557 = vpop.f32.mrb[0].mxu0
      %v558 = vadd.f32 0.0, %v557
      %v559 = vpop.f32.mrb[0].mxu0
      %560 = vmatprep.mubr.f32.mxu0 0.0
      %561 = vmatmul.mubr.f32.gmra.mrb[0].mxu0 %v463
      %v562 = vpop.f32.mrb[0].mxu0
      %v563 = vadd.f32 0.0, %v562
      %v564 = vpop.f32.mrb[0].mxu0
      %565 = vmatprep.mubr.f32.mxu0 0.0
      %566 = vmatmul.mubr.f32.gmra.mrb[0].mxu0 %v466
      %v567 = vpop.f32.mrb[0].mxu0
      %v568 = vadd.f32 0.0, %v567
      %v569 = vpop.f32.mrb[0].mxu0
      %570 = vmatprep.mubr.f32.mxu0 0.0
      %571 = vmatmul.mubr.f32.gmra.mrb[0].mxu0 %v469
      %v572 = vpop.f32.mrb[0].mxu0
      %v573 = vadd.f32 0.0, %v572
      %v574 = vpop.f32.mrb[0].mxu0
      %575 = vdwg.mxu0
      %v577 = vsel %vm446, %v363, 0
      %v580 = vsel %vm446, %v368, 0
      %v583 = vsel %vm446, %v373, 0
      %v586 = vsel %vm446, %v378, 0
      %v589 = vsel %vm446, %v383, 0
      %v592 = vsel %vm446, %v388, 0
      %v595 = vsel %vm446, %v393, 0
      %v598 = vsel %vm446, %v398, 0
      %600 = vmatprep.subr.mxu0 0.0
      %601 = vmatpush1.msra.mxu0 %v441
      %602 = vmatprep.subr.mxu0 0.0
      %603 = vmatpush1.msra.mxu0 %v442
      %604 = vmatprep.subr.mxu0 0.0
      %605 = vmatpush1.msra.mxu0 0.0
      %606 = vmatprep.subr.mxu0 0.0
      %607 = vmatpush1.msra.mxu0 0.0
      %608 = vmatprep.subr.mxu0 0.0
      %609 = vmatpush1.msra.mxu0 0.0
      %610 = vmatprep.subr.mxu0 0.0
      %611 = vmatpush1.msra.mxu0 0.0
      %612 = vmatprep.subr.mxu0 0.0
      %613 = vmatpush1.msra.mxu0 0.0
      %614 = vmatprep.subr.mxu0 0.0
      %615 = vmatpush1.msra.mxu0 0.0
      %616 = vmatprep.subr.mxu0 0.0
      %617 = vmatpush1.msra.mxu0 0.0
      %618 = vmatprep.subr.mxu0 0.0
      %619 = vmatpush1.msra.mxu0 0.0
      %620 = vmatprep.subr.mxu0 0.0
      %621 = vmatpush1.msra.mxu0 0.0
      %622 = vmatprep.subr.mxu0 0.0
      %623 = vmatpush1.msra.mxu0 0.0
      %624 = vmatprep.subr.mxu0 0.0
      %625 = vmatpush1.msra.mxu0 0.0
      %626 = vmatprep.subr.mxu0 0.0
      %627 = vmatpush1.msra.mxu0 0.0
      %628 = vmatprep.subr.mxu0 0.0
      %629 = vmatpush1.msra.mxu0 0.0
      %630 = vmatprep.subr.mxu0 0.0
      %631 = vmatpush1.msra.mxu0 0.0
      %632 = vmatprep.subr.mxu0 0.0
      %633 = vmatpush1.msra.mxu0 0.0
      %634 = vmatprep.subr.mxu0 0.0
      %635 = vmatpush1.msra.mxu0 0.0
      %636 = vmatprep.subr.mxu0 0.0
      %637 = vmatpush1.msra.mxu0 0.0
      %638 = vmatprep.subr.mxu0 0.0
      %639 = vmatpush1.msra.mxu0 0.0
      %640 = vmatprep.subr.mxu0 0.0
      %641 = vmatpush1.msra.mxu0 0.0
      %642 = vmatprep.subr.mxu0 0.0
      %643 = vmatpush1.msra.mxu0 0.0
      %644 = vmatprep.subr.mxu0 0.0
      %645 = vmatpush1.msra.mxu0 0.0
      %646 = vmatprep.subr.mxu0 0.0
      %647 = vmatpush1.msra.mxu0 0.0
      %648 = vmatprep.subr.mxu0 0.0
      %649 = vmatpush1.msra.mxu0 0.0
      %650 = vmatprep.subr.mxu0 0.0
      %651 = vmatpush1.msra.mxu0 0.0
      %652 = vmatprep.subr.mxu0 0.0
      %653 = vmatpush1.msra.mxu0 0.0
      %654 = vmatprep.subr.mxu0 0.0
      %655 = vmatpush1.msra.mxu0 0.0
      %656 = vmatprep.subr.mxu0 0.0
      %657 = vmatpush1.msra.mxu0 0.0
      %658 = vmatprep.subr.mxu0 0.0
      %659 = vmatpush1.msra.mxu0 0.0
      %660 = vmatprep.subr.mxu0 0.0
      %661 = vmatpush1.msra.mxu0 0.0
      %662 = vmatprep.subr.mxu0 0.0
      %663 = vmatpush1.msra.mxu0 0.0
      %664 = vmatprep.mubr.f32.mxu0 0.0
      %665 = vmatmul.mubr.f32.gmra.mrb[0].mxu0 %v577
      %v666 = vpop.f32.mrb[0].mxu0
      %v667 = vadd.f32 %v538, %v666
      %v668 = vpop.f32.mrb[0].mxu0
      %669 = vmatprep.mubr.f32.mxu0 0.0
      %670 = vmatmul.mubr.f32.gmra.mrb[0].mxu0 %v580
      %v671 = vpop.f32.mrb[0].mxu0
      %v672 = vadd.f32 %v543, %v671
      %v673 = vpop.f32.mrb[0].mxu0
      %674 = vmatprep.mubr.f32.mxu0 0.0
      %675 = vmatmul.mubr.f32.gmra.mrb[0].mxu0 %v583
      %v676 = vpop.f32.mrb[0].mxu0
      %v677 = vadd.f32 %v548, %v676
      %v678 = vpop.f32.mrb[0].mxu0
      %679 = vmatprep.mubr.f32.mxu0 0.0
      %680 = vmatmul.mubr.f32.gmra.mrb[0].mxu0 %v586
      %v681 = vpop.f32.mrb[0].mxu0
      %v682 = vadd.f32 %v553, %v681
      %v683 = vpop.f32.mrb[0].mxu0
      %684 = vmatprep.mubr.f32.mxu0 0.0
      %685 = vmatmul.mubr.f32.gmra.mrb[0].mxu0 %v589
      %v686 = vpop.f32.mrb[0].mxu0
      %v687 = vadd.f32 %v558, %v686
      %v688 = vpop.f32.mrb[0].mxu0
      %689 = vmatprep.mubr.f32.mxu0 0.0
      %690 = vmatmul.mubr.f32.gmra.mrb[0].mxu0 %v592
      %v691 = vpop.f32.mrb[0].mxu0
      %v692 = vadd.f32 %v563, %v691
      %v693 = vpop.f32.mrb[0].mxu0
      %694 = vmatprep.mubr.f32.mxu0 0.0
      %695 = vmatmul.mubr.f32.gmra.mrb[0].mxu0 %v595
      %v696 = vpop.f32.mrb[0].mxu0
      %v697 = vadd.f32 %v568, %v696
      %v698 = vpop.f32.mrb[0].mxu0
      %699 = vmatprep.mubr.f32.mxu0 0.0
      %700 = vmatmul.mubr.f32.gmra.mrb[0].mxu0 %v598
      %v701 = vpop.f32.mrb[0].mxu0
      %v702 = vadd.f32 %v573, %v701
      %v703 = vpop.f32.mrb[0].mxu0
      %704 = vdwg.mxu0
      %v705 = vld [vmem:[%s3] sm:$0xff]
      %v706 = vld [vmem:[%s3 + $0x8] sm:$0xff]
      %v707 = vld [vmem:[%s3 + $0x10] sm:$0xff]
      %v708 = vld [vmem:[%s3 + $0x18] sm:$0xff]
      %v709 = vld [vmem:[%s3 + $0x20] sm:$0xff]
      %v710 = vld [vmem:[%s3 + $0x28] sm:$0xff]
      %v711 = vld [vmem:[%s3 + $0x30] sm:$0xff]
      %v712 = vld [vmem:[%s3 + $0x38] sm:$0xff]
      %714 = vset.pattern.permute.xlu0 0
      %715 = vperm.xlu0 %714, %v705
      %v716 = vpop.permute.xlu0 %715
      %719 = vset.pattern.permute.xlu0 0
      %720 = vperm.xlu0 %719, %v706
      %v721 = vpop.permute.xlu0 %720
      %724 = vset.pattern.permute.xlu0 0
      %725 = vperm.xlu0 %724, %v707
      %v726 = vpop.permute.xlu0 %725
      %729 = vset.pattern.permute.xlu0 0
      %730 = vperm.xlu0 %729, %v708
      %v731 = vpop.permute.xlu0 %730
      %734 = vset.pattern.permute.xlu0 0
      %735 = vperm.xlu0 %734, %v709
      %v736 = vpop.permute.xlu0 %735
      %739 = vset.pattern.permute.xlu0 0
      %740 = vperm.xlu0 %739, %v710
      %v741 = vpop.permute.xlu0 %740
      %744 = vset.pattern.permute.xlu0 0
      %745 = vperm.xlu0 %744, %v711
      %v746 = vpop.permute.xlu0 %745
      %749 = vset.pattern.permute.xlu0 0
      %750 = vperm.xlu0 %749, %v712
      %v751 = vpop.permute.xlu0 %750
      %v753 = vadd.f32 %v667, %v716
      %v754 = vadd.f32 %v672, %v721
      %v755 = vadd.f32 %v677, %v726
      %v756 = vadd.f32 %v682, %v731
      %v757 = vadd.f32 %v687, %v736
      %v758 = vadd.f32 %v692, %v741
      %v759 = vadd.f32 %v697, %v746
      %v760 = vadd.f32 %v702, %v751
      %vm761 = vcmask 261120
      %762 = vst.msk [vmem:[%s225] sm:$0xff] %vm761, %v753
      %763 = vst.msk [vmem:[%s225 + $0x8] sm:$0xff] %vm761, %v754
      %764 = vst.msk [vmem:[%s225 + $0x10] sm:$0xff] %vm761, %v755
      %765 = vst.msk [vmem:[%s225 + $0x18] sm:$0xff] %vm761, %v756
      %766 = vst.msk [vmem:[%s225 + $0x20] sm:$0xff] %vm761, %v757
      %767 = vst.msk [vmem:[%s225 + $0x28] sm:$0xff] %vm761, %v758
      %768 = vst.msk [vmem:[%s225 + $0x30] sm:$0xff] %vm761, %v759
      %769 = vst.msk [vmem:[%s225 + $0x38] sm:$0xff] %vm761, %v760
      %p770 = scmp.lt.s32.totalorder %s19, 1
      %s771 = scalar_select %p770, %s19, 1
      %p772 = scmp.lt.s32.totalorder %s20, 0
      %s773 = scalar_select %p772, %s20, 0
      %s774 = smul.addr %s771, 8
      %s775 = sadd.s32 %s773, %s774
      %s776 = smul.addr %s775, 8
      %s777 = scalar_lea.vmem %s4, %s776
      // Predicated region
      $region37: #{up_forward.1} parent=35 // pred_check
        %p778 = pneg %p138
      $region38: #{up_forward.1} parent=35 // pred_check_branch
        %780 = sbr.rel (%p778) target = $region40
      $region39: #{up_forward.1} parent=35 // pred_region
        _
      $region40: #{up_forward.1} parent=35 // pred_fallthru
        _
    $region36: #{up_forward.1} parent=5 // pred_fallthru
      _
    %p781 = scmp.le.s32.totalorder 2, %s10
    // Predicated region
    $region41: #{up_forward.1} parent=5 // pred_check
      %p782 = pneg %p781
    $region42: #{up_forward.1} parent=5 // pred_check_branch
      %784 = sbr.rel (%p782) target = $region44
    $region43: #{up_forward.1} parent=5 // pred_region
      %s785 = ssub.s32 %s10, 2
      // Predicated region
      $region45: #{up_forward.1} parent=43 // pred_check
        %p786 = pneg %p144
      $region46: #{up_forward.1} parent=43 // pred_check_branch
        %788 = sbr.rel (%p786) target = $region48
      $region47: #{up_forward.1} parent=43 // pred_region
        %p789 = scmp.lt.s32.totalorder %s21, 1
        %s790 = scalar_select %p789, %s21, 1
        %p791 = scmp.lt.s32.totalorder %s22, 0
        %s792 = scalar_select %p791, %s22, 0
        %s793 = smul.addr %s790, 8
        %s794 = sadd.s32 %s792, %s793
        %s795 = smul.addr %s794, 8
        %s796 = scalar_lea.vmem %s4, %s795
      $region48: #{up_forward.1} parent=43 // pred_fallthru
        _
    $region44: #{up_forward.1} parent=5 // pred_fallthru
      _
  $region6: #{up_forward.1} parent=0 // loop_footer
    %s14 = sadd.s32 1, %s10
  $region7: #{up_forward.1} parent=0 // loop_footer_branch
    %9 = sbr.rel target = $region3
  $region8: #{up_forward.1} parent=0 // loop_exit
    _

</llo_original>
